<compile_context>
chip_gen: v7x
topology: tpu7x:2x2x1
jax: 0.10.0
libtpu: 0.0.40
codegen_flags: <defaults>
</compile_context>

<pallas_src>
import functools

import jax
import jax.numpy as jnp
from jax.experimental import pallas as pl
from jax.experimental.pallas import tpu as pltpu


# ---------------------------------------------------------------------------
# Pallas kernel: fused MLP (Linear+ReLU, Linear+ReLU, Linear) + tanh
# ---------------------------------------------------------------------------
def _policy_kernel(x_ref, w1_ref, b1_ref, w2_ref, b2_ref, w3_ref, b3_ref, mu_ref):
    x = x_ref[...]                                            # (Bp, Dp) f32

    # Weights arrive as bf16 (half the HBM->VMEM DMA); cast up, compute in f32.
    w1 = w1_ref[...].astype(jnp.float32)
    w2 = w2_ref[...].astype(jnp.float32)
    w3 = w3_ref[...].astype(jnp.float32)

    h1 = jnp.dot(x, w1, preferred_element_type=jnp.float32) + b1_ref[...]
    h1 = jnp.maximum(h1, 0.0)                                 # ReLU

    h2 = jnp.dot(h1, w2, preferred_element_type=jnp.float32) + b2_ref[...]
    h2 = jnp.maximum(h2, 0.0)                                 # ReLU

    means = jnp.dot(h2, w3, preferred_element_type=jnp.float32) + b3_ref[...]
    mu_ref[...] = jnp.tanh(means)


def _pad_to(n, m):
    return ((n + m - 1) // m) * m


# ---------------------------------------------------------------------------
# One-time parameter preparation (pad + cast).  Done ONCE, outside the hot path.
# ---------------------------------------------------------------------------
def prepare_params(params, weight_dtype=jnp.bfloat16):
    """Pad weights to TPU-friendly shapes and cast them to bf16 — once."""
    w1, b1, w2, b2, w3, b3 = params
    D_in, H1 = w1.shape
    H2, A = w3.shape
    Dp = _pad_to(D_in, 128)
    Ap = _pad_to(A, 128)        # keep output lane-dense (full 128-lane slab)

    w1_p = jnp.pad(jnp.asarray(w1, weight_dtype), ((0, Dp - D_in), (0, 0)))
    w2_p = jnp.asarray(w2, weight_dtype)
    w3_p = jnp.pad(jnp.asarray(w3, weight_dtype), ((0, 0), (0, Ap - A)))
    b1_p = jnp.asarray(b1, jnp.float32).reshape(1, H1)
    b2_p = jnp.asarray(b2, jnp.float32).reshape(1, H2)
    b3_p = jnp.pad(jnp.asarray(b3, jnp.float32).reshape(1, A), ((0, 0), (0, Ap - A)))
    return (w1_p, b1_p, w2_p, b2_p, w3_p, b3_p)


# ---------------------------------------------------------------------------
# Forward wrapper (jit): pad x, run fused kernel, slice back, build std array.
# ---------------------------------------------------------------------------
@functools.partial(jax.jit, static_argnames=("action_dim",))
def truncated_gaussian_policy_forward(feature_action, padded_params, std, action_dim):
    """Returns (mu, std) — the parameters of the TruncatedNormal distribution."""
    w1_p, b1_p, w2_p, b2_p, w3_p, b3_p = padded_params
    B, D_in = feature_action.shape
    Dp, H1 = w1_p.shape
    H2, Ap = w3_p.shape
    A = action_dim

    Bp = _pad_to(max(B, 8), 8)
    # Single pad op (zero rows/lanes keep the math exact).
    x_p = jnp.pad(feature_action.astype(jnp.float32), ((0, Bp - B), (0, Dp - D_in)))

    flops = 2 * Bp * (Dp * H1 + H1 * H2 + H2 * Ap)
    bytes_accessed = (
        Bp * Dp * 4                                   # x in
        + (Dp * H1 + H1 * H2 + H2 * Ap) * 2           # bf16 weights
        + (H1 + H2 + Ap) * 4                          # f32 biases
        + Bp * Ap * 4                                 # mu out
    )

    vmem = pl.BlockSpec(memory_space=pltpu.MemorySpace.VMEM)

    mu_p = pl.pallas_call(
        _policy_kernel,
        out_shape=jax.ShapeDtypeStruct((Bp, Ap), jnp.float32),
        in_specs=[vmem] * 7,
        out_specs=vmem,
        cost_estimate=pl.CostEstimate(
            flops=flops, transcendentals=Bp * Ap, bytes_accessed=bytes_accessed),
    )(x_p, w1_p, b1_p, w2_p, b2_p, w3_p, b3_p)

    mu = mu_p[:B, :A]
    # std is constant data: build it in the wrapper instead of writing it back
    # from the kernel (semantics: ones_like(mu) * std).
    std_arr = jnp.full((B, A), std, jnp.float32)
    return mu, std_arr


# ---------------------------------------------------------------------------
# Deterministic parameter initialization (stand-in for utils.initialize_weight)
# ---------------------------------------------------------------------------
def init_params(key, d_in, hidden_units, d_out):
    dims = [d_in, *hidden_units, d_out]
    params = []
    for i in range(len(dims) - 1):
        key, wk = jax.random.split(key)
        fan_in = dims[i]
        w = jax.random.normal(wk, (dims[i], dims[i + 1]), jnp.float32) / jnp.sqrt(fan_in)
        b = jnp.zeros((dims[i + 1],), jnp.float32)
        params.extend([w, b])
    return tuple(params)


# ---------------------------------------------------------------------------
# Pure-JAX reference (uses the same bf16-stored weights, f32 compute)
# ---------------------------------------------------------------------------
def reference_forward(x, padded_params, std, action_dim):
    w1_p, b1_p, w2_p, b2_p, w3_p, b3_p = padded_params
    D_in = x.shape[1]
    w1 = w1_p[:D_in].astype(jnp.float32)
    w2 = w2_p.astype(jnp.float32)
    w3 = w3_p[:, :action_dim].astype(jnp.float32)
    b1 = b1_p[0]
    b2 = b2_p[0]
    b3 = b3_p[0, :action_dim]
    hp = jax.lax.Precision.HIGHEST
    h1 = jnp.maximum(jnp.dot(x, w1, precision=hp) + b1, 0.0)
    h2 = jnp.maximum(jnp.dot(h1, w2, precision=hp) + b2, 0.0)
    mu = jnp.tanh(jnp.dot(h2, w3, precision=hp) + b3)
    return mu, jnp.ones_like(mu) * std


if __name__ == "__main__":
    # Small shapes consistent with the module's __init__:
    #   input_dim = num_sequences * feature_dim + (num_sequences - 1) * action_dim
    batch = 2
    num_sequences = 4
    feature_dim = 32
    action_dim = 4
    hidden_units = (256, 256)
    d_in = num_sequences * feature_dim + (num_sequences - 1) * action_dim  # 140

    key = jax.random.PRNGKey(0)
    k_x, k_p = jax.random.split(key)
    feature_action = jax.random.normal(k_x, (batch, d_in), jnp.float32)
    params = init_params(k_p, d_in, hidden_units, action_dim)
    std = 0.1

    # Pad / cast the weights once (NOT per forward call).
    padded_params = prepare_params(params)
    padded_params = jax.block_until_ready(padded_params)

    mu, std_out = truncated_gaussian_policy_forward(
        feature_action, padded_params, std, action_dim=action_dim)
    jax.block_until_ready((mu, std_out))

    # TODO(synk): TruncatedNormal sampling / log_prob (distribution object) is not a
    # kernel-side op; we return the (mu, std) parameters that define it.
    mu_ref, std_ref = reference_forward(feature_action, padded_params, std, action_dim)
    assert mu.shape == (batch, action_dim) and std_out.shape == (batch, action_dim)
    assert jnp.allclose(mu, mu_ref, atol=1e-3), "mu mismatch vs reference"
    assert jnp.allclose(std_out, std_ref, atol=1e-6), "std mismatch vs reference"

    print("KERNEL_OK")
</pallas_src>

<mosaic_0001>
module attributes {stable_mosaic.version = 11 : i64} {
  func.func @_policy_kernel(%arg0: memref<8x256xf32, #tpu.memory_space<vmem>>, %arg1: memref<256x256xbf16, #tpu.memory_space<vmem>>, %arg2: memref<1x256xf32, #tpu.memory_space<vmem>>, %arg3: memref<256x256xbf16, #tpu.memory_space<vmem>>, %arg4: memref<1x256xf32, #tpu.memory_space<vmem>>, %arg5: memref<256x128xbf16, #tpu.memory_space<vmem>>, %arg6: memref<1x128xf32, #tpu.memory_space<vmem>>, %arg7: memref<8x128xf32, #tpu.memory_space<vmem>>) attributes {dimension_semantics = [], scalar_prefetch = 0 : i64, scratch_operands = 0 : i64, tpu.core_type = #tpu.core_type<tc>} {
    %c0 = arith.constant 0 : index
    %c0_0 = arith.constant 0 : index
    %0 = vector.load %arg0[%c0, %c0_0] : memref<8x256xf32, #tpu.memory_space<vmem>>, vector<8x256xf32>
    %c0_1 = arith.constant 0 : index
    %c0_2 = arith.constant 0 : index
    %1 = vector.load %arg1[%c0_1, %c0_2] : memref<256x256xbf16, #tpu.memory_space<vmem>>, vector<256x256xbf16>
    %2 = arith.extf %1 : vector<256x256xbf16> to vector<256x256xf32>
    %c0_3 = arith.constant 0 : index
    %c0_4 = arith.constant 0 : index
    %3 = vector.load %arg3[%c0_3, %c0_4] : memref<256x256xbf16, #tpu.memory_space<vmem>>, vector<256x256xbf16>
    %4 = arith.extf %3 : vector<256x256xbf16> to vector<256x256xf32>
    %c0_5 = arith.constant 0 : index
    %c0_6 = arith.constant 0 : index
    %5 = vector.load %arg5[%c0_5, %c0_6] : memref<256x128xbf16, #tpu.memory_space<vmem>>, vector<256x128xbf16>
    %6 = arith.extf %5 : vector<256x128xbf16> to vector<256x128xf32>
    %cst = arith.constant dense<0.000000e+00> : vector<8x256xf32>
    %7 = tpu.matmul %0, %2, %cst {dimension_numbers = #tpu.dot_dimension_numbers<[1], [0], [0], [1], [0, 0, 1, 1], [], []>} : vector<8x256xf32>, vector<256x256xf32>, vector<8x256xf32> -> vector<8x256xf32>
    %c0_7 = arith.constant 0 : index
    %c0_8 = arith.constant 0 : index
    %8 = vector.load %arg2[%c0_7, %c0_8] : memref<1x256xf32, #tpu.memory_space<vmem>>, vector<1x256xf32>
    %9 = vector.broadcast %8 : vector<1x256xf32> to vector<8x256xf32>
    %10 = arith.addf %7, %9 : vector<8x256xf32>
    %cst_9 = arith.constant 0.000000e+00 : f32
    %11 = vector.broadcast %cst_9 : f32 to vector<8x256xf32>
    %12 = arith.maximumf %10, %11 : vector<8x256xf32>
    %cst_10 = arith.constant dense<0.000000e+00> : vector<8x256xf32>
    %13 = tpu.matmul %12, %4, %cst_10 {dimension_numbers = #tpu.dot_dimension_numbers<[1], [0], [0], [1], [0, 0, 1, 1], [], []>} : vector<8x256xf32>, vector<256x256xf32>, vector<8x256xf32> -> vector<8x256xf32>
    %c0_11 = arith.constant 0 : index
    %c0_12 = arith.constant 0 : index
    %14 = vector.load %arg4[%c0_11, %c0_12] : memref<1x256xf32, #tpu.memory_space<vmem>>, vector<1x256xf32>
    %15 = vector.broadcast %14 : vector<1x256xf32> to vector<8x256xf32>
    %16 = arith.addf %13, %15 : vector<8x256xf32>
    %cst_13 = arith.constant 0.000000e+00 : f32
    %17 = vector.broadcast %cst_13 : f32 to vector<8x256xf32>
    %18 = arith.maximumf %16, %17 : vector<8x256xf32>
    %cst_14 = arith.constant dense<0.000000e+00> : vector<8x128xf32>
    %19 = tpu.matmul %18, %6, %cst_14 {dimension_numbers = #tpu.dot_dimension_numbers<[1], [0], [0], [1], [0, 0, 1, 1], [], []>} : vector<8x256xf32>, vector<256x128xf32>, vector<8x128xf32> -> vector<8x128xf32>
    %c0_15 = arith.constant 0 : index
    %c0_16 = arith.constant 0 : index
    %20 = vector.load %arg6[%c0_15, %c0_16] : memref<1x128xf32, #tpu.memory_space<vmem>>, vector<1x128xf32>
    %21 = vector.broadcast %20 : vector<1x128xf32> to vector<8x128xf32>
    %22 = arith.addf %19, %21 : vector<8x128xf32>
    %23 = math.tanh %22 : vector<8x128xf32>
    %c0_17 = arith.constant 0 : index
    %c0_18 = arith.constant 0 : index
    %24 = vector.load %arg7[%c0_17, %c0_18] : memref<8x128xf32, #tpu.memory_space<vmem>>, vector<8x128xf32>
    tpu.vector_store %arg7[%c0_17, %c0_18], %23 {strides = array<i32>} : memref<8x128xf32, #tpu.memory_space<vmem>>, vector<8x128xf32>,
    return
  }
}

</mosaic_0001>

<llo_original>
// kernel: truncated_gaussian_policy_forward.1
$region0: #{truncated_gaussian_policy_forward.1}
  #allocation0 [shape = 'u32[]', space=smem, size = 0x4, offset = 0x4, fixed_abs, tag = 'smem constant byte address 0x4 - core index']
  #allocation1 [shape = 'u32[144,128]{1,0:T(1,128)}', space=vmem, size = 0x12000, scoped, tag = 'internal scratch']
  %s0 = inlined_call_operand.vmem [shape: f32[8,256], index: 0, kind: input, shape index: {}]
  %s1 = inlined_call_operand.hbm [shape: bf16[256,256], index: 1, kind: input, shape index: {}]
  %s2 = inlined_call_operand.vmem [shape: f32[1,256], index: 2, kind: input, shape index: {}]
  %s3 = inlined_call_operand.hbm [shape: bf16[256,256], index: 3, kind: input, shape index: {}]
  %s4 = inlined_call_operand.vmem [shape: f32[1,256], index: 4, kind: input, shape index: {}]
  %s5 = inlined_call_operand.hbm [shape: bf16[256,128], index: 5, kind: input, shape index: {}]
  %s6 = inlined_call_operand.vmem [shape: f32[1,128], index: 6, kind: input, shape index: {}]
  %s7 = inlined_call_operand.vmem [shape: f32[8,128], index: 7, kind: output, shape index: {}]
  %s8 = sld [smem:[#allocation0]]
  $region50: #{truncated_gaussian_policy_forward.1} parent=0
    _
  %s10 = ssub.s32 1, %s8
  %s11 = scalar_select 0, %s10, %s8
  $region1: #{truncated_gaussian_policy_forward.1} parent=0
    #allocation2 [shape = 'u8[131072]{0}', space=vmem, size = 0x20000, scoped, tag = 'input window, operand 1, single buffered']
    #allocation3 [shape = 's32[1]{0}', space=sflag, size = 0x4, scoped, tag = 'scoped memory for truncated_gaussian_policy_forward.1']
    #allocation4 [shape = 'u8[131072]{0}', space=vmem, size = 0x20000, scoped, tag = 'input window, operand 3, single buffered']
    #allocation5 [shape = 's32[1]{0}', space=sflag, size = 0x4, scoped, tag = 'scoped memory for truncated_gaussian_policy_forward.1']
    #allocation6 [shape = 'u8[65536]{0}', space=vmem, size = 0x10000, scoped, tag = 'input window, operand 5, single buffered']
    %12 = vsyncpa [#allocation3], 0
    %13 = vsyncpa [#allocation5], 0
    // Predicated region
    $region2: #{truncated_gaussian_policy_forward.1} parent=1 // pred_check
      _
    $region3: #{truncated_gaussian_policy_forward.1} parent=1 // pred_check_branch
      %15 = sbr.rel (0) target = $region5
    $region4: #{truncated_gaussian_policy_forward.1} parent=1 // pred_region
      _
    $region5: #{truncated_gaussian_policy_forward.1} parent=1 // pred_fallthru
      _
    // Predicated region
    $region6: #{truncated_gaussian_policy_forward.1} parent=1 // pred_check
      _
    $region7: #{truncated_gaussian_policy_forward.1} parent=1 // pred_check_branch
      %17 = sbr.rel (0) target = $region9
    $region8: #{truncated_gaussian_policy_forward.1} parent=1 // pred_region
      %s19 = ssub.s32 4096, 4096
      %20 = vsyncadd [#allocation3], %s19
      %s21 = sshll.u32 [#allocation2], 4
      %s22 = int_to_ptr.vmem [resolvable:$true] %s21
      %27 = dma.hbm_to_vmem [thread:$0]  %s1, 4096, %s22, [#allocation3], 128, 128, 8
    $region9: #{truncated_gaussian_policy_forward.1} parent=1 // pred_fallthru
      _
    // Predicated region
    $region10: #{truncated_gaussian_policy_forward.1} parent=1 // pred_check
      _
    $region11: #{truncated_gaussian_policy_forward.1} parent=1 // pred_check_branch
      %29 = sbr.rel (0) target = $region13
    $region12: #{truncated_gaussian_policy_forward.1} parent=1 // pred_region
      _
    $region13: #{truncated_gaussian_policy_forward.1} parent=1 // pred_fallthru
      _
    // Predicated region
    $region14: #{truncated_gaussian_policy_forward.1} parent=1 // pred_check
      _
    $region15: #{truncated_gaussian_policy_forward.1} parent=1 // pred_check_branch
      %31 = sbr.rel (0) target = $region17
    $region16: #{truncated_gaussian_policy_forward.1} parent=1 // pred_region
      %s33 = ssub.s32 4096, 4096
      %34 = vsyncadd [#allocation5], %s33
      %s35 = sshll.u32 [#allocation4], 4
      %s36 = int_to_ptr.vmem [resolvable:$true] %s35
      %41 = dma.hbm_to_vmem [thread:$0]  %s3, 4096, %s36, [#allocation5], 128, 128, 8
    $region17: #{truncated_gaussian_policy_forward.1} parent=1 // pred_fallthru
      _
    // Predicated region
    $region18: #{truncated_gaussian_policy_forward.1} parent=1 // pred_check
      _
    $region19: #{truncated_gaussian_policy_forward.1} parent=1 // pred_check_branch
      %43 = sbr.rel (0) target = $region21
    $region20: #{truncated_gaussian_policy_forward.1} parent=1 // pred_region
      _
    $region21: #{truncated_gaussian_policy_forward.1} parent=1 // pred_fallthru
      _
    // Predicated region
    $region22: #{truncated_gaussian_policy_forward.1} parent=1 // pred_check
      _
    $region23: #{truncated_gaussian_policy_forward.1} parent=1 // pred_check_branch
      %45 = sbr.rel (0) target = $region25
    $region24: #{truncated_gaussian_policy_forward.1} parent=1 // pred_region
      %s47 = ssub.s32 2048, 2048
      %48 = vsyncadd [#allocation5], %s47
      %s49 = sshll.u32 [#allocation6], 4
      %s50 = int_to_ptr.vmem [resolvable:$true] %s49
      %55 = dma.hbm_to_vmem [thread:$0]  %s5, 2048, %s50, [#allocation5], 64, 64, 4
    $region25: #{truncated_gaussian_policy_forward.1} parent=1 // pred_fallthru
      _
    // Predicated region
    $region26: #{truncated_gaussian_policy_forward.1} parent=1 // pred_check
      _
    $region27: #{truncated_gaussian_policy_forward.1} parent=1 // pred_check_branch
      %57 = sbr.rel (0) target = $region29
    $region28: #{truncated_gaussian_policy_forward.1} parent=1 // pred_region
      _
    $region29: #{truncated_gaussian_policy_forward.1} parent=1 // pred_fallthru
      _
    // Predicated region
    $region30: #{truncated_gaussian_policy_forward.1} parent=1 // pred_check
      _
    $region31: #{truncated_gaussian_policy_forward.1} parent=1 // pred_check_branch
      %59 = sbr.rel (0) target = $region33
    $region32: #{truncated_gaussian_policy_forward.1} parent=1 // pred_region
      %60 = dma.done [#allocation3], 4096
    $region33: #{truncated_gaussian_policy_forward.1} parent=1 // pred_fallthru
      _
    // Predicated region
    $region34: #{truncated_gaussian_policy_forward.1} parent=1 // pred_check
      _
    $region35: #{truncated_gaussian_policy_forward.1} parent=1 // pred_check_branch
      %62 = sbr.rel (0) target = $region37
    $region36: #{truncated_gaussian_policy_forward.1} parent=1 // pred_region
      %63 = dma.done [#allocation5], 4096
    $region37: #{truncated_gaussian_policy_forward.1} parent=1 // pred_fallthru
      _
    // Predicated region
    $region38: #{truncated_gaussian_policy_forward.1} parent=1 // pred_check
      _
    $region39: #{truncated_gaussian_policy_forward.1} parent=1 // pred_check_branch
      %65 = sbr.rel (0) target = $region41
    $region40: #{truncated_gaussian_policy_forward.1} parent=1 // pred_region
      %66 = dma.done [#allocation5], 2048
    $region41: #{truncated_gaussian_policy_forward.1} parent=1 // pred_fallthru
      _
    %v67 = vld [vmem:[%s0] sm:$0xff]
    %v68 = vld [vmem:[%s0 + $0x8] sm:$0xff]
    %v69 = vld [vmem:[#allocation2] sm:$0xff]
    %v70 = vld [vmem:[#allocation2 + $0x8] sm:$0xff]
    %v71 = vld [vmem:[#allocation2 + $0x10] sm:$0xff]
    %v72 = vld [vmem:[#allocation2 + $0x18] sm:$0xff]
    %v73 = vld [vmem:[#allocation2 + $0x20] sm:$0xff]
    %v74 = vld [vmem:[#allocation2 + $0x28] sm:$0xff]
    %v75 = vld [vmem:[#allocation2 + $0x30] sm:$0xff]
    %v76 = vld [vmem:[#allocation2 + $0x38] sm:$0xff]
    %v77 = vld [vmem:[#allocation2 + $0x40] sm:$0xff]
    %v78 = vld [vmem:[#allocation2 + $0x48] sm:$0xff]
    %v79 = vld [vmem:[#allocation2 + $0x50] sm:$0xff]
    %v80 = vld [vmem:[#allocation2 + $0x58] sm:$0xff]
    %v81 = vld [vmem:[#allocation2 + $0x60] sm:$0xff]
    %v82 = vld [vmem:[#allocation2 + $0x68] sm:$0xff]
    %v83 = vld [vmem:[#allocation2 + $0x70] sm:$0xff]
    %v84 = vld [vmem:[#allocation2 + $0x78] sm:$0xff]
    %v85 = vld [vmem:[#allocation2 + $0x80] sm:$0xff]
    %v86 = vld [vmem:[#allocation2 + $0x88] sm:$0xff]
    %v87 = vld [vmem:[#allocation2 + $0x90] sm:$0xff]
    %v88 = vld [vmem:[#allocation2 + $0x98] sm:$0xff]
    %v89 = vld [vmem:[#allocation2 + $0xa0] sm:$0xff]
    %v90 = vld [vmem:[#allocation2 + $0xa8] sm:$0xff]
    %v91 = vld [vmem:[#allocation2 + $0xb0] sm:$0xff]
    %v92 = vld [vmem:[#allocation2 + $0xb8] sm:$0xff]
    %v93 = vld [vmem:[#allocation2 + $0xc0] sm:$0xff]
    %v94 = vld [vmem:[#allocation2 + $0xc8] sm:$0xff]
    %v95 = vld [vmem:[#allocation2 + $0xd0] sm:$0xff]
    %v96 = vld [vmem:[#allocation2 + $0xd8] sm:$0xff]
    %v97 = vld [vmem:[#allocation2 + $0xe0] sm:$0xff]
    %v98 = vld [vmem:[#allocation2 + $0xe8] sm:$0xff]
    %v99 = vld [vmem:[#allocation2 + $0xf0] sm:$0xff]
    %v100 = vld [vmem:[#allocation2 + $0xf8] sm:$0xff]
    %v101 = vunpack.c.l.bf16 %v69
    %v102 = vunpack.c.h.bf16 %v69
    %v103 = vunpack.c.l.bf16 %v70
    %v104 = vunpack.c.h.bf16 %v70
    %v105 = vunpack.c.l.bf16 %v71
    %v106 = vunpack.c.h.bf16 %v71
    %v107 = vunpack.c.l.bf16 %v72
    %v108 = vunpack.c.h.bf16 %v72
    %v109 = vunpack.c.l.bf16 %v73
    %v110 = vunpack.c.h.bf16 %v73
    %v111 = vunpack.c.l.bf16 %v74
    %v112 = vunpack.c.h.bf16 %v74
    %v113 = vunpack.c.l.bf16 %v75
    %v114 = vunpack.c.h.bf16 %v75
    %v115 = vunpack.c.l.bf16 %v76
    %v116 = vunpack.c.h.bf16 %v76
    %v117 = vunpack.c.l.bf16 %v77
    %v118 = vunpack.c.h.bf16 %v77
    %v119 = vunpack.c.l.bf16 %v78
    %v120 = vunpack.c.h.bf16 %v78
    %v121 = vunpack.c.l.bf16 %v79
    %v122 = vunpack.c.h.bf16 %v79
    %v123 = vunpack.c.l.bf16 %v80
    %v124 = vunpack.c.h.bf16 %v80
    %v125 = vunpack.c.l.bf16 %v81
    %v126 = vunpack.c.h.bf16 %v81
    %v127 = vunpack.c.l.bf16 %v82
    %v128 = vunpack.c.h.bf16 %v82
    %v129 = vunpack.c.l.bf16 %v83
    %v130 = vunpack.c.h.bf16 %v83
    %v131 = vunpack.c.l.bf16 %v84
    %v132 = vunpack.c.h.bf16 %v84
    %v133 = vunpack.c.l.bf16 %v85
    %v134 = vunpack.c.h.bf16 %v85
    %v135 = vunpack.c.l.bf16 %v86
    %v136 = vunpack.c.h.bf16 %v86
    %v137 = vunpack.c.l.bf16 %v87
    %v138 = vunpack.c.h.bf16 %v87
    %v139 = vunpack.c.l.bf16 %v88
    %v140 = vunpack.c.h.bf16 %v88
    %v141 = vunpack.c.l.bf16 %v89
    %v142 = vunpack.c.h.bf16 %v89
    %v143 = vunpack.c.l.bf16 %v90
    %v144 = vunpack.c.h.bf16 %v90
    %v145 = vunpack.c.l.bf16 %v91
    %v146 = vunpack.c.h.bf16 %v91
    %v147 = vunpack.c.l.bf16 %v92
    %v148 = vunpack.c.h.bf16 %v92
    %v149 = vunpack.c.l.bf16 %v93
    %v150 = vunpack.c.h.bf16 %v93
    %v151 = vunpack.c.l.bf16 %v94
    %v152 = vunpack.c.h.bf16 %v94
    %v153 = vunpack.c.l.bf16 %v95
    %v154 = vunpack.c.h.bf16 %v95
    %v155 = vunpack.c.l.bf16 %v96
    %v156 = vunpack.c.h.bf16 %v96
    %v157 = vunpack.c.l.bf16 %v97
    %v158 = vunpack.c.h.bf16 %v97
    %v159 = vunpack.c.l.bf16 %v98
    %v160 = vunpack.c.h.bf16 %v98
    %v161 = vunpack.c.l.bf16 %v99
    %v162 = vunpack.c.h.bf16 %v99
    %v163 = vunpack.c.l.bf16 %v100
    %v164 = vunpack.c.h.bf16 %v100
    %v165 = vld [vmem:[#allocation4] sm:$0xff]
    %v166 = vld [vmem:[#allocation4 + $0x8] sm:$0xff]
    %v167 = vld [vmem:[#allocation4 + $0x10] sm:$0xff]
    %v168 = vld [vmem:[#allocation4 + $0x18] sm:$0xff]
    %v169 = vld [vmem:[#allocation4 + $0x20] sm:$0xff]
    %v170 = vld [vmem:[#allocation4 + $0x28] sm:$0xff]
    %v171 = vld [vmem:[#allocation4 + $0x30] sm:$0xff]
    %v172 = vld [vmem:[#allocation4 + $0x38] sm:$0xff]
    %v173 = vld [vmem:[#allocation4 + $0x40] sm:$0xff]
    %v174 = vld [vmem:[#allocation4 + $0x48] sm:$0xff]
    %v175 = vld [vmem:[#allocation4 + $0x50] sm:$0xff]
    %v176 = vld [vmem:[#allocation4 + $0x58] sm:$0xff]
    %v177 = vld [vmem:[#allocation4 + $0x60] sm:$0xff]
    %v178 = vld [vmem:[#allocation4 + $0x68] sm:$0xff]
    %v179 = vld [vmem:[#allocation4 + $0x70] sm:$0xff]
    %v180 = vld [vmem:[#allocation4 + $0x78] sm:$0xff]
    %v181 = vld [vmem:[#allocation4 + $0x80] sm:$0xff]
    %v182 = vld [vmem:[#allocation4 + $0x88] sm:$0xff]
    %v183 = vld [vmem:[#allocation4 + $0x90] sm:$0xff]
    %v184 = vld [vmem:[#allocation4 + $0x98] sm:$0xff]
    %v185 = vld [vmem:[#allocation4 + $0xa0] sm:$0xff]
    %v186 = vld [vmem:[#allocation4 + $0xa8] sm:$0xff]
    %v187 = vld [vmem:[#allocation4 + $0xb0] sm:$0xff]
    %v188 = vld [vmem:[#allocation4 + $0xb8] sm:$0xff]
    %v189 = vld [vmem:[#allocation4 + $0xc0] sm:$0xff]
    %v190 = vld [vmem:[#allocation4 + $0xc8] sm:$0xff]
    %v191 = vld [vmem:[#allocation4 + $0xd0] sm:$0xff]
    %v192 = vld [vmem:[#allocation4 + $0xd8] sm:$0xff]
    %v193 = vld [vmem:[#allocation4 + $0xe0] sm:$0xff]
    %v194 = vld [vmem:[#allocation4 + $0xe8] sm:$0xff]
    %v195 = vld [vmem:[#allocation4 + $0xf0] sm:$0xff]
    %v196 = vld [vmem:[#allocation4 + $0xf8] sm:$0xff]
    %v197 = vunpack.c.l.bf16 %v165
    %v198 = vunpack.c.h.bf16 %v165
    %v199 = vunpack.c.l.bf16 %v166
    %v200 = vunpack.c.h.bf16 %v166
    %v201 = vunpack.c.l.bf16 %v167
    %v202 = vunpack.c.h.bf16 %v167
    %v203 = vunpack.c.l.bf16 %v168
    %v204 = vunpack.c.h.bf16 %v168
    %v205 = vunpack.c.l.bf16 %v169
    %v206 = vunpack.c.h.bf16 %v169
    %v207 = vunpack.c.l.bf16 %v170
    %v208 = vunpack.c.h.bf16 %v170
    %v209 = vunpack.c.l.bf16 %v171
    %v210 = vunpack.c.h.bf16 %v171
    %v211 = vunpack.c.l.bf16 %v172
    %v212 = vunpack.c.h.bf16 %v172
    %v213 = vunpack.c.l.bf16 %v173
    %v214 = vunpack.c.h.bf16 %v173
    %v215 = vunpack.c.l.bf16 %v174
    %v216 = vunpack.c.h.bf16 %v174
    %v217 = vunpack.c.l.bf16 %v175
    %v218 = vunpack.c.h.bf16 %v175
    %v219 = vunpack.c.l.bf16 %v176
    %v220 = vunpack.c.h.bf16 %v176
    %v221 = vunpack.c.l.bf16 %v177
    %v222 = vunpack.c.h.bf16 %v177
    %v223 = vunpack.c.l.bf16 %v178
    %v224 = vunpack.c.h.bf16 %v178
    %v225 = vunpack.c.l.bf16 %v179
    %v226 = vunpack.c.h.bf16 %v179
    %v227 = vunpack.c.l.bf16 %v180
    %v228 = vunpack.c.h.bf16 %v180
    %v229 = vunpack.c.l.bf16 %v181
    %v230 = vunpack.c.h.bf16 %v181
    %v231 = vunpack.c.l.bf16 %v182
    %v232 = vunpack.c.h.bf16 %v182
    %v233 = vunpack.c.l.bf16 %v183
    %v234 = vunpack.c.h.bf16 %v183
    %v235 = vunpack.c.l.bf16 %v184
    %v236 = vunpack.c.h.bf16 %v184
    %v237 = vunpack.c.l.bf16 %v185
    %v238 = vunpack.c.h.bf16 %v185
    %v239 = vunpack.c.l.bf16 %v186
    %v240 = vunpack.c.h.bf16 %v186
    %v241 = vunpack.c.l.bf16 %v187
    %v242 = vunpack.c.h.bf16 %v187
    %v243 = vunpack.c.l.bf16 %v188
    %v244 = vunpack.c.h.bf16 %v188
    %v245 = vunpack.c.l.bf16 %v189
    %v246 = vunpack.c.h.bf16 %v189
    %v247 = vunpack.c.l.bf16 %v190
    %v248 = vunpack.c.h.bf16 %v190
    %v249 = vunpack.c.l.bf16 %v191
    %v250 = vunpack.c.h.bf16 %v191
    %v251 = vunpack.c.l.bf16 %v192
    %v252 = vunpack.c.h.bf16 %v192
    %v253 = vunpack.c.l.bf16 %v193
    %v254 = vunpack.c.h.bf16 %v193
    %v255 = vunpack.c.l.bf16 %v194
    %v256 = vunpack.c.h.bf16 %v194
    %v257 = vunpack.c.l.bf16 %v195
    %v258 = vunpack.c.h.bf16 %v195
    %v259 = vunpack.c.l.bf16 %v196
    %v260 = vunpack.c.h.bf16 %v196
    %v261 = vld [vmem:[#allocation6] sm:$0xf]
    %v262 = vld [vmem:[#allocation6 + $0x4] sm:$0xf]
    %v263 = vld [vmem:[#allocation6 + $0x8] sm:$0xf]
    %v264 = vld [vmem:[#allocation6 + $0xc] sm:$0xf]
    %v265 = vld [vmem:[#allocation6 + $0x10] sm:$0xf]
    %v266 = vld [vmem:[#allocation6 + $0x14] sm:$0xf]
    %v267 = vld [vmem:[#allocation6 + $0x18] sm:$0xf]
    %v268 = vld [vmem:[#allocation6 + $0x1c] sm:$0xf]
    %v269 = vld [vmem:[#allocation6 + $0x20] sm:$0xf]
    %v270 = vld [vmem:[#allocation6 + $0x24] sm:$0xf]
    %v271 = vld [vmem:[#allocation6 + $0x28] sm:$0xf]
    %v272 = vld [vmem:[#allocation6 + $0x2c] sm:$0xf]
    %v273 = vld [vmem:[#allocation6 + $0x30] sm:$0xf]
    %v274 = vld [vmem:[#allocation6 + $0x34] sm:$0xf]
    %v275 = vld [vmem:[#allocation6 + $0x38] sm:$0xf]
    %v276 = vld [vmem:[#allocation6 + $0x3c] sm:$0xf]
    %v277 = vld [vmem:[#allocation6 + $0x40] sm:$0xf]
    %v278 = vld [vmem:[#allocation6 + $0x44] sm:$0xf]
    %v279 = vld [vmem:[#allocation6 + $0x48] sm:$0xf]
    %v280 = vld [vmem:[#allocation6 + $0x4c] sm:$0xf]
    %v281 = vld [vmem:[#allocation6 + $0x50] sm:$0xf]
    %v282 = vld [vmem:[#allocation6 + $0x54] sm:$0xf]
    %v283 = vld [vmem:[#allocation6 + $0x58] sm:$0xf]
    %v284 = vld [vmem:[#allocation6 + $0x5c] sm:$0xf]
    %v285 = vld [vmem:[#allocation6 + $0x60] sm:$0xf]
    %v286 = vld [vmem:[#allocation6 + $0x64] sm:$0xf]
    %v287 = vld [vmem:[#allocation6 + $0x68] sm:$0xf]
    %v288 = vld [vmem:[#allocation6 + $0x6c] sm:$0xf]
    %v289 = vld [vmem:[#allocation6 + $0x70] sm:$0xf]
    %v290 = vld [vmem:[#allocation6 + $0x74] sm:$0xf]
    %v291 = vld [vmem:[#allocation6 + $0x78] sm:$0xf]
    %v292 = vld [vmem:[#allocation6 + $0x7c] sm:$0xf]
    %v293 = vunpack.c.l.bf16 %v261
    %v294 = vunpack.c.l.bf16 %v262
    %v295 = vunpack.c.l.bf16 %v263
    %v296 = vunpack.c.l.bf16 %v264
    %v297 = vunpack.c.l.bf16 %v265
    %v298 = vunpack.c.l.bf16 %v266
    %v299 = vunpack.c.l.bf16 %v267
    %v300 = vunpack.c.l.bf16 %v268
    %v301 = vunpack.c.l.bf16 %v269
    %v302 = vunpack.c.l.bf16 %v270
    %v303 = vunpack.c.l.bf16 %v271
    %v304 = vunpack.c.l.bf16 %v272
    %v305 = vunpack.c.l.bf16 %v273
    %v306 = vunpack.c.l.bf16 %v274
    %v307 = vunpack.c.l.bf16 %v275
    %v308 = vunpack.c.l.bf16 %v276
    %v309 = vunpack.c.l.bf16 %v277
    %v310 = vunpack.c.l.bf16 %v278
    %v311 = vunpack.c.l.bf16 %v279
    %v312 = vunpack.c.l.bf16 %v280
    %v313 = vunpack.c.l.bf16 %v281
    %v314 = vunpack.c.l.bf16 %v282
    %v315 = vunpack.c.l.bf16 %v283
    %v316 = vunpack.c.l.bf16 %v284
    %v317 = vunpack.c.l.bf16 %v285
    %v318 = vunpack.c.l.bf16 %v286
    %v319 = vunpack.c.l.bf16 %v287
    %v320 = vunpack.c.l.bf16 %v288
    %v321 = vunpack.c.l.bf16 %v289
    %v322 = vunpack.c.l.bf16 %v290
    %v323 = vunpack.c.l.bf16 %v291
    %v324 = vunpack.c.l.bf16 %v292
    %v325 = vld [vmem:[%s2] sm:$0x3]
    %v327 = vlaneseq
    %v328 = vshrl.u32 %v327, 7
    %v329 = vsub.s32 0, %v328
    %v330 = vrot.slane %v325, %v329
    %v331 = vlaneseq
    %v332 = vshrl.u32 %v331, 7
    %v333 = vsub.s32 1, %v332
    %v334 = vrot.slane %v325, %v333
    %337 = vmatprep.subr.mxu0 %v102
    %338 = vmatpush1.msra.mxu0 %v101
    %339 = vmatprep.subr.mxu0 %v104
    %340 = vmatpush1.msra.mxu0 %v103
    %341 = vmatprep.subr.mxu0 %v106
    %342 = vmatpush1.msra.mxu0 %v105
    %343 = vmatprep.subr.mxu0 %v108
    %344 = vmatpush1.msra.mxu0 %v107
    %345 = vmatprep.subr.mxu0 %v110
    %346 = vmatpush1.msra.mxu0 %v109
    %347 = vmatprep.subr.mxu0 %v112
    %348 = vmatpush1.msra.mxu0 %v111
    %349 = vmatprep.subr.mxu0 %v114
    %350 = vmatpush1.msra.mxu0 %v113
    %351 = vmatprep.subr.mxu0 %v116
    %352 = vmatpush1.msra.mxu0 %v115
    %353 = vmatprep.subr.mxu0 %v118
    %354 = vmatpush1.msra.mxu0 %v117
    %355 = vmatprep.subr.mxu0 %v120
    %356 = vmatpush1.msra.mxu0 %v119
    %357 = vmatprep.subr.mxu0 %v122
    %358 = vmatpush1.msra.mxu0 %v121
    %359 = vmatprep.subr.mxu0 %v124
    %360 = vmatpush1.msra.mxu0 %v123
    %361 = vmatprep.subr.mxu0 %v126
    %362 = vmatpush1.msra.mxu0 %v125
    %363 = vmatprep.subr.mxu0 %v128
    %364 = vmatpush1.msra.mxu0 %v127
    %365 = vmatprep.subr.mxu0 %v130
    %366 = vmatpush1.msra.mxu0 %v129
    %367 = vmatprep.subr.mxu0 %v132
    %368 = vmatpush1.msra.mxu0 %v131
    %369 = vmatprep.subr.mxu0 %v134
    %370 = vmatpush1.msra.mxu0 %v133
    %371 = vmatprep.subr.mxu0 %v136
    %372 = vmatpush1.msra.mxu0 %v135
    %373 = vmatprep.subr.mxu0 %v138
    %374 = vmatpush1.msra.mxu0 %v137
    %375 = vmatprep.subr.mxu0 %v140
    %376 = vmatpush1.msra.mxu0 %v139
    %377 = vmatprep.subr.mxu0 %v142
    %378 = vmatpush1.msra.mxu0 %v141
    %379 = vmatprep.subr.mxu0 %v144
    %380 = vmatpush1.msra.mxu0 %v143
    %381 = vmatprep.subr.mxu0 %v146
    %382 = vmatpush1.msra.mxu0 %v145
    %383 = vmatprep.subr.mxu0 %v148
    %384 = vmatpush1.msra.mxu0 %v147
    %385 = vmatprep.subr.mxu0 %v150
    %386 = vmatpush1.msra.mxu0 %v149
    %387 = vmatprep.subr.mxu0 %v152
    %388 = vmatpush1.msra.mxu0 %v151
    %389 = vmatprep.subr.mxu0 %v154
    %390 = vmatpush1.msra.mxu0 %v153
    %391 = vmatprep.subr.mxu0 %v156
    %392 = vmatpush1.msra.mxu0 %v155
    %393 = vmatprep.subr.mxu0 %v158
    %394 = vmatpush1.msra.mxu0 %v157
    %395 = vmatprep.subr.mxu0 %v160
    %396 = vmatpush1.msra.mxu0 %v159
    %397 = vmatprep.subr.mxu0 %v162
    %398 = vmatpush1.msra.mxu0 %v161
    %399 = vmatprep.subr.mxu0 %v164
    %400 = vmatpush1.msra.mxu0 %v163
    %401 = vmatprep.mubr.f32.mxu0 %v68
    %402 = vmatmul.mubr.f32.gmra.mrb[0].mxu0 %v67
    %v403 = vpop.f32.mrb[0].mxu0
    %v404 = vadd.f32 %v330, %v403
    %v405 = vpop.f32.mrb[0].mxu0
    %v406 = vadd.f32 %v334, %v405
    %407 = vdwg.mxu0
    %v408 = vmax.f32 %v404, 0.0
    %v409 = vmax.f32 %v406, 0.0
    %v410 = vld [vmem:[%s4] sm:$0x3]
    %v412 = vlaneseq
    %v413 = vshrl.u32 %v412, 7
    %v414 = vsub.s32 0, %v413
    %v415 = vrot.slane %v410, %v414
    %v416 = vlaneseq
    %v417 = vshrl.u32 %v416, 7
    %v418 = vsub.s32 1, %v417
    %v419 = vrot.slane %v410, %v418
    %422 = vmatprep.subr.mxu0 %v198
    %423 = vmatpush1.msra.mxu0 %v197
    %424 = vmatprep.subr.mxu0 %v200
    %425 = vmatpush1.msra.mxu0 %v199
    %426 = vmatprep.subr.mxu0 %v202
    %427 = vmatpush1.msra.mxu0 %v201
    %428 = vmatprep.subr.mxu0 %v204
    %429 = vmatpush1.msra.mxu0 %v203
    %430 = vmatprep.subr.mxu0 %v206
    %431 = vmatpush1.msra.mxu0 %v205
    %432 = vmatprep.subr.mxu0 %v208
    %433 = vmatpush1.msra.mxu0 %v207
    %434 = vmatprep.subr.mxu0 %v210
    %435 = vmatpush1.msra.mxu0 %v209
    %436 = vmatprep.subr.mxu0 %v212
    %437 = vmatpush1.msra.mxu0 %v211
    %438 = vmatprep.subr.mxu0 %v214
    %439 = vmatpush1.msra.mxu0 %v213
    %440 = vmatprep.subr.mxu0 %v216
    %441 = vmatpush1.msra.mxu0 %v215
    %442 = vmatprep.subr.mxu0 %v218
    %443 = vmatpush1.msra.mxu0 %v217
    %444 = vmatprep.subr.mxu0 %v220
    %445 = vmatpush1.msra.mxu0 %v219
    %446 = vmatprep.subr.mxu0 %v222
    %447 = vmatpush1.msra.mxu0 %v221
    %448 = vmatprep.subr.mxu0 %v224
    %449 = vmatpush1.msra.mxu0 %v223
    %450 = vmatprep.subr.mxu0 %v226
    %451 = vmatpush1.msra.mxu0 %v225
    %452 = vmatprep.subr.mxu0 %v228
    %453 = vmatpush1.msra.mxu0 %v227
    %454 = vmatprep.subr.mxu0 %v230
    %455 = vmatpush1.msra.mxu0 %v229
    %456 = vmatprep.subr.mxu0 %v232
    %457 = vmatpush1.msra.mxu0 %v231
    %458 = vmatprep.subr.mxu0 %v234
    %459 = vmatpush1.msra.mxu0 %v233
    %460 = vmatprep.subr.mxu0 %v236
    %461 = vmatpush1.msra.mxu0 %v235
    %462 = vmatprep.subr.mxu0 %v238
    %463 = vmatpush1.msra.mxu0 %v237
    %464 = vmatprep.subr.mxu0 %v240
    %465 = vmatpush1.msra.mxu0 %v239
    %466 = vmatprep.subr.mxu0 %v242
    %467 = vmatpush1.msra.mxu0 %v241
    %468 = vmatprep.subr.mxu0 %v244
    %469 = vmatpush1.msra.mxu0 %v243
    %470 = vmatprep.subr.mxu0 %v246
    %471 = vmatpush1.msra.mxu0 %v245
    %472 = vmatprep.subr.mxu0 %v248
    %473 = vmatpush1.msra.mxu0 %v247
    %474 = vmatprep.subr.mxu0 %v250
    %475 = vmatpush1.msra.mxu0 %v249
    %476 = vmatprep.subr.mxu0 %v252
    %477 = vmatpush1.msra.mxu0 %v251
    %478 = vmatprep.subr.mxu0 %v254
    %479 = vmatpush1.msra.mxu0 %v253
    %480 = vmatprep.subr.mxu0 %v256
    %481 = vmatpush1.msra.mxu0 %v255
    %482 = vmatprep.subr.mxu0 %v258
    %483 = vmatpush1.msra.mxu0 %v257
    %484 = vmatprep.subr.mxu0 %v260
    %485 = vmatpush1.msra.mxu0 %v259
    %486 = vmatprep.mubr.f32.mxu0 %v409
    %487 = vmatmul.mubr.f32.gmra.mrb[0].mxu0 %v408
    %v488 = vpop.f32.mrb[0].mxu0
    %v489 = vadd.f32 %v415, %v488
    %v490 = vpop.f32.mrb[0].mxu0
    %v491 = vadd.f32 %v419, %v490
    %492 = vdwg.mxu0
    %v493 = vmax.f32 %v489, 0.0
    %v494 = vmax.f32 %v491, 0.0
    %v495 = vld [vmem:[%s6] sm:$0x1]
    %v497 = vlaneseq
    %v498 = vshrl.u32 %v497, 7
    %v499 = vsub.s32 0, %v498
    %v500 = vrot.slane %v495, %v499
    %502 = vmatprep.subr.mxu0 0.0
    %503 = vmatpush1.msra.mxu0 %v293
    %504 = vmatprep.subr.mxu0 0.0
    %505 = vmatpush1.msra.mxu0 %v294
    %506 = vmatprep.subr.mxu0 0.0
    %507 = vmatpush1.msra.mxu0 %v295
    %508 = vmatprep.subr.mxu0 0.0
    %509 = vmatpush1.msra.mxu0 %v296
    %510 = vmatprep.subr.mxu0 0.0
    %511 = vmatpush1.msra.mxu0 %v297
    %512 = vmatprep.subr.mxu0 0.0
    %513 = vmatpush1.msra.mxu0 %v298
    %514 = vmatprep.subr.mxu0 0.0
    %515 = vmatpush1.msra.mxu0 %v299
    %516 = vmatprep.subr.mxu0 0.0
    %517 = vmatpush1.msra.mxu0 %v300
    %518 = vmatprep.subr.mxu0 0.0
    %519 = vmatpush1.msra.mxu0 %v301
    %520 = vmatprep.subr.mxu0 0.0
    %521 = vmatpush1.msra.mxu0 %v302
    %522 = vmatprep.subr.mxu0 0.0
    %523 = vmatpush1.msra.mxu0 %v303
    %524 = vmatprep.subr.mxu0 0.0
    %525 = vmatpush1.msra.mxu0 %v304
    %526 = vmatprep.subr.mxu0 0.0
    %527 = vmatpush1.msra.mxu0 %v305
    %528 = vmatprep.subr.mxu0 0.0
    %529 = vmatpush1.msra.mxu0 %v306
    %530 = vmatprep.subr.mxu0 0.0
    %531 = vmatpush1.msra.mxu0 %v307
    %532 = vmatprep.subr.mxu0 0.0
    %533 = vmatpush1.msra.mxu0 %v308
    %534 = vmatprep.subr.mxu0 0.0
    %535 = vmatpush1.msra.mxu0 %v309
    %536 = vmatprep.subr.mxu0 0.0
    %537 = vmatpush1.msra.mxu0 %v310
    %538 = vmatprep.subr.mxu0 0.0
    %539 = vmatpush1.msra.mxu0 %v311
    %540 = vmatprep.subr.mxu0 0.0
    %541 = vmatpush1.msra.mxu0 %v312
    %542 = vmatprep.subr.mxu0 0.0
    %543 = vmatpush1.msra.mxu0 %v313
    %544 = vmatprep.subr.mxu0 0.0
    %545 = vmatpush1.msra.mxu0 %v314
    %546 = vmatprep.subr.mxu0 0.0
    %547 = vmatpush1.msra.mxu0 %v315
    %548 = vmatprep.subr.mxu0 0.0
    %549 = vmatpush1.msra.mxu0 %v316
    %550 = vmatprep.subr.mxu0 0.0
    %551 = vmatpush1.msra.mxu0 %v317
    %552 = vmatprep.subr.mxu0 0.0
    %553 = vmatpush1.msra.mxu0 %v318
    %554 = vmatprep.subr.mxu0 0.0
    %555 = vmatpush1.msra.mxu0 %v319
    %556 = vmatprep.subr.mxu0 0.0
    %557 = vmatpush1.msra.mxu0 %v320
    %558 = vmatprep.subr.mxu0 0.0
    %559 = vmatpush1.msra.mxu0 %v321
    %560 = vmatprep.subr.mxu0 0.0
    %561 = vmatpush1.msra.mxu0 %v322
    %562 = vmatprep.subr.mxu0 0.0
    %563 = vmatpush1.msra.mxu0 %v323
    %564 = vmatprep.subr.mxu0 0.0
    %565 = vmatpush1.msra.mxu0 %v324
    %566 = vmatprep.mubr.f32.mxu0 %v494
    %567 = vmatmul.mubr.f32.gmra.mrb[0].mxu0 %v493
    %v568 = vpop.f32.mrb[0].mxu0
    %v569 = vadd.f32 %v500, %v568
    %v570 = vpop.f32.mrb[0].mxu0
    %571 = vdwg.mxu0
    %v572 = vtanh.pop %v569
    %573 = vst [vmem:[%s7] sm:$0xff] %v572
    // Predicated region
    $region42: #{truncated_gaussian_policy_forward.1} parent=1 // pred_check
      _
    $region43: #{truncated_gaussian_policy_forward.1} parent=1 // pred_check_branch
      %575 = sbr.rel (0) target = $region45
    $region44: #{truncated_gaussian_policy_forward.1} parent=1 // pred_region
      _
    $region45: #{truncated_gaussian_policy_forward.1} parent=1 // pred_fallthru
      _
    // Predicated region
    $region46: #{truncated_gaussian_policy_forward.1} parent=1 // pred_check
      _
    $region47: #{truncated_gaussian_policy_forward.1} parent=1 // pred_check_branch
      %577 = sbr.rel (0) target = $region49
    $region48: #{truncated_gaussian_policy_forward.1} parent=1 // pred_region
      _
    $region49: #{truncated_gaussian_policy_forward.1} parent=1 // pred_fallthru
      _
    %578 = vsyncpa [#allocation3], 1
    %579 = vsyncpa [#allocation5], 1

</llo_original>
